<compile_context>
chip_gen: v7x
topology: tpu7x:2x2x1
jax: 0.10.0
libtpu: 0.0.40
codegen_flags: <defaults>
</compile_context>

<pallas_src>
import jax
import jax.numpy as jnp
from jax.experimental import pallas as pl
from jax.experimental.pallas import tpu as pltpu


def _relation_kernel(xT_ref, w_ref, b_ref, oT_ref):
    # xT_ref: (D_in, TM)   -- rows-on-lanes slice of x^T
    # w_ref : (D_E, D_in)  -- native PyTorch layout, VMEM-resident
    # b_ref : (D_E, 1)
    # oT_ref: (D_E, TM)
    acc = jnp.dot(w_ref[...], xT_ref[...], preferred_element_type=jnp.float32)
    oT_ref[...] = (acc + b_ref[...]).astype(oT_ref.dtype)


def _round_up(x, m):
    return ((x + m - 1) // m) * m


def relation_model_forward(B, weight, bias, *, tm_max=16384):
    """Pallas implementation of nn.Linear applied to the last axis of B.

    B:      (..., D_in)   float32
    weight: (D_E, D_in)   float32  (PyTorch layout, used as-is)
    bias:   (D_E,)        float32
    returns (..., D_E)    float32
    """
    D_in = B.shape[-1]
    D_E = weight.shape[0]
    lead_shape = B.shape[:-1]
    M = 1
    for s in lead_shape:
        M *= s

    # Rows on the lane axis: x^T is (D_in, M).
    xT = B.reshape(M, D_in).T

    # Tile size on the lane axis: multiple of 128, capped so double-buffered
    # (in + out) tiles stay a few MiB (safe on v7x's smaller VMEM).
    TM = min(tm_max, _round_up(M, 128))
    M_pad = _round_up(M, TM)
    if M_pad != M:
        xT = jnp.pad(xT, ((0, 0), (0, M_pad - M)))

    b2d = bias.reshape(D_E, 1)
    grid = (M_pad // TM,)

    outT = pl.pallas_call(
        _relation_kernel,
        out_shape=jax.ShapeDtypeStruct((D_E, M_pad), B.dtype),
        grid_spec=pltpu.PrefetchScalarGridSpec(
            num_scalar_prefetch=0,
            grid=grid,
            in_specs=[
                pl.BlockSpec((D_in, TM), lambda i: (0, i)),   # x^T row tile
                pl.BlockSpec((D_E, D_in), lambda i: (0, 0)),  # weight (resident)
                pl.BlockSpec((D_E, 1), lambda i: (0, 0)),     # bias (resident)
            ],
            out_specs=pl.BlockSpec((D_E, TM), lambda i: (0, i)),
        ),
        compiler_params=pltpu.CompilerParams(
            dimension_semantics=("parallel",),       # shard row tiles on v7x
            vmem_limit_bytes=64 * 1024 * 1024,
        ),
    )(xT, weight, b2d)

    out2d = outT[:, :M].T  # back to (M, D_E)
    return out2d.reshape(*lead_shape, D_E)


if __name__ == "__main__":
    # Shapes implied by the module: D_S, D_R node/relation feature dims, D_E
    # effect dim.  Input B has last dim D_S + D_S + D_R.
    D_S, D_R, D_E = 6, 4, 32
    D_in = D_S + D_S + D_R  # 16
    batch, n_relations = 2, 8

    key = jax.random.PRNGKey(0)
    k_b, k_w, k_bias, k_b2 = jax.random.split(key, 4)

    # Deterministic synthetic parameters (matches nn.Linear default init range).
    bound = 1.0 / (D_in ** 0.5)
    weight = jax.random.uniform(k_w, (D_E, D_in), jnp.float32, -bound, bound)
    bias = jax.random.uniform(k_bias, (D_E,), jnp.float32, -bound, bound)

    # Small demo shape.
    B = jax.random.normal(k_b, (batch, n_relations, D_in), jnp.float32)
    out = relation_model_forward(B, weight, bias)
    out = jax.block_until_ready(out)
    ref = B @ weight.T + bias
    assert out.shape == (batch, n_relations, D_E)
    assert jnp.allclose(out, ref, atol=1e-5, rtol=1e-5)

    # Larger M exercising the multi-tile (grid > 1) + padding path.
    B2 = jax.random.normal(k_b2, (4, 400, D_in), jnp.float32)  # M = 1600
    out2 = relation_model_forward(B2, weight, bias, tm_max=256)  # grid = (7,)
    out2 = jax.block_until_ready(out2)
    ref2 = B2 @ weight.T + bias
    assert out2.shape == (4, 400, D_E)
    assert jnp.allclose(out2, ref2, atol=1e-5, rtol=1e-5)

    print("KERNEL_OK")
</pallas_src>

<mosaic_0001>
module attributes {stable_mosaic.version = 11 : i64} {
  func.func @_relation_kernel(%arg0: i32, %arg1: memref<16x128xf32, #tpu.memory_space<vmem>>, %arg2: memref<32x16xf32, #tpu.memory_space<vmem>>, %arg3: memref<32x1xf32, #tpu.memory_space<vmem>>, %arg4: memref<32x128xf32, #tpu.memory_space<vmem>>) attributes {dimension_semantics = [#tpu.dimension_semantics<parallel>], iteration_bounds = array<i64: 1>, scalar_prefetch = 0 : i64, scratch_operands = 0 : i64, tpu.core_type = #tpu.core_type<tc>, window_params = [{transform_indices = @transform_0, window_bounds = array<i64: 16, 128>}, {pipeline_mode = #tpu.pipeline_mode<synchronous>, transform_indices = @transform_1, window_bounds = array<i64: 32, 16>}, {pipeline_mode = #tpu.pipeline_mode<synchronous>, transform_indices = @transform_2, window_bounds = array<i64: 32, 1>}, {transform_indices = @transform_3, window_bounds = array<i64: 32, 128>}]} {
    %c0 = arith.constant 0 : index
    %c0_0 = arith.constant 0 : index
    %0 = vector.load %arg2[%c0, %c0_0] : memref<32x16xf32, #tpu.memory_space<vmem>>, vector<32x16xf32>
    %c0_1 = arith.constant 0 : index
    %c0_2 = arith.constant 0 : index
    %1 = vector.load %arg1[%c0_1, %c0_2] : memref<16x128xf32, #tpu.memory_space<vmem>>, vector<16x128xf32>
    %cst = arith.constant dense<0.000000e+00> : vector<32x128xf32>
    %2 = tpu.matmul %0, %1, %cst {dimension_numbers = #tpu.dot_dimension_numbers<[1], [0], [0], [1], [0, 0, 1, 1], [], []>} : vector<32x16xf32>, vector<16x128xf32>, vector<32x128xf32> -> vector<32x128xf32>
    %c0_3 = arith.constant 0 : index
    %c0_4 = arith.constant 0 : index
    %3 = vector.load %arg3[%c0_3, %c0_4] : memref<32x1xf32, #tpu.memory_space<vmem>>, vector<32x1xf32>
    %4 = vector.broadcast %3 : vector<32x1xf32> to vector<32x128xf32>
    %5 = arith.addf %2, %4 : vector<32x128xf32>
    %c0_5 = arith.constant 0 : index
    %c0_6 = arith.constant 0 : index
    %6 = vector.load %arg4[%c0_5, %c0_6] : memref<32x128xf32, #tpu.memory_space<vmem>>, vector<32x128xf32>
    tpu.vector_store %arg4[%c0_5, %c0_6], %5 {strides = array<i32>} : memref<32x128xf32, #tpu.memory_space<vmem>>, vector<32x128xf32>,
    return
  }
  func.func @transform_0(%arg0: i32) -> (i32, i32) {
    %c0_i32 = arith.constant 0 : i32
    %c0_i32_0 = arith.constant 0 : i32
    return %c0_i32, %arg0 : i32, i32
  }
  func.func @transform_1(%arg0: i32) -> (i32, i32) {
    %c0_i32 = arith.constant 0 : i32
    %c0_i32_0 = arith.constant 0 : i32
    %c0_i32_1 = arith.constant 0 : i32
    return %c0_i32, %c0_i32_0 : i32, i32
  }
  func.func @transform_2(%arg0: i32) -> (i32, i32) {
    %c0_i32 = arith.constant 0 : i32
    %c0_i32_0 = arith.constant 0 : i32
    %c0_i32_1 = arith.constant 0 : i32
    return %c0_i32, %c0_i32_0 : i32, i32
  }
  func.func @transform_3(%arg0: i32) -> (i32, i32) {
    %c0_i32 = arith.constant 0 : i32
    %c0_i32_0 = arith.constant 0 : i32
    return %c0_i32, %arg0 : i32, i32
  }
}

</mosaic_0001>

<llo_original>
// kernel: tpu_custom_call.1
$region0: #{tpu_custom_call.1}
  #allocation0 [shape = 'u32[]', space=smem, size = 0x4, offset = 0x4, fixed_abs, tag = 'smem constant byte address 0x4 - core index']
  #allocation1 [shape = 'u32[144,128]{1,0:T(1,128)}', space=vmem, size = 0x12000, scoped, tag = 'internal scratch']
  %s0 = inlined_call_operand.hbm [shape: f32[16,128], index: 0, kind: input, shape index: {}]
  %s1 = inlined_call_operand.hbm [shape: f32[32,16], index: 1, kind: input, shape index: {}]
  %s2 = inlined_call_operand.hbm [shape: f32[32,1], index: 2, kind: input, shape index: {}]
  %s3 = inlined_call_operand.hbm [shape: f32[32,128], index: 3, kind: output, shape index: {}]
  %s4 = sld [smem:[#allocation0]]
  $region34: #{tpu_custom_call.1} parent=0
    _
  %s6 = ssub.s32 1, %s4
  %s7 = scalar_select 0, %s6, %s4
  $region1: #{tpu_custom_call.1} parent=0
    #allocation2 [shape = 'u8[8192]{0}', space=vmem, size = 0x2000, scoped, tag = 'input window, operand 0, single buffered']
    #allocation3 [shape = 's32[1]{0}', space=sflag, size = 0x4, scoped, tag = 'scoped memory for tpu_custom_call.1']
    #allocation4 [shape = 's32[1]{0}', space=sflag, size = 0x4, scoped, tag = 'scoped memory for tpu_custom_call.1']
    #allocation5 [shape = 'u8[16384]{0}', space=vmem, size = 0x4000, scoped, tag = 'input window, operand 1, single buffered']
    #allocation6 [shape = 's32[1]{0}', space=sflag, size = 0x4, scoped, tag = 'scoped memory for tpu_custom_call.1']
    #allocation7 [shape = 'u8[16384]{0}', space=vmem, size = 0x4000, scoped, tag = 'input window, operand 2, single buffered']
    #allocation8 [shape = 'u8[16384]{0}', space=vmem, size = 0x4000, scoped, tag = 'output window, operand 0, single buffered']
    %8 = vsyncpa [#allocation3], 0
    %9 = vsyncpa [#allocation6], 0
    %10 = vsyncpa [#allocation4], 0
    // Predicated region
    $region2: #{tpu_custom_call.1} parent=1 // pred_check
      _
    $region3: #{tpu_custom_call.1} parent=1 // pred_check_branch
      %12 = sbr.rel (0) target = $region5
    $region4: #{tpu_custom_call.1} parent=1 // pred_region
      %s14 = ssub.s32 256, 256
      %15 = vsyncadd [#allocation3], %s14
      %s16 = sshll.u32 [#allocation2], 4
      %s17 = int_to_ptr.vmem [resolvable:$true] %s16
      %22 = dma.hbm_to_vmem [thread:$0]  %s0, 256, %s17, [#allocation3], 128, 128, 8
    $region5: #{tpu_custom_call.1} parent=1 // pred_fallthru
      _
    // Predicated region
    $region6: #{tpu_custom_call.1} parent=1 // pred_check
      _
    $region7: #{tpu_custom_call.1} parent=1 // pred_check_branch
      %24 = sbr.rel (0) target = $region9
    $region8: #{tpu_custom_call.1} parent=1 // pred_region
      %s26 = ssub.s32 512, 512
      %27 = vsyncadd [#allocation6], %s26
      %s28 = sshll.u32 [#allocation5], 4
      %s29 = int_to_ptr.vmem [resolvable:$true] %s28
      %34 = dma.hbm_to_vmem [thread:$0]  %s1, 512, %s29, [#allocation6], 128, 128, 8
    $region9: #{tpu_custom_call.1} parent=1 // pred_fallthru
      _
    // Predicated region
    $region10: #{tpu_custom_call.1} parent=1 // pred_check
      _
    $region11: #{tpu_custom_call.1} parent=1 // pred_check_branch
      %36 = sbr.rel (0) target = $region13
    $region12: #{tpu_custom_call.1} parent=1 // pred_region
      %s38 = ssub.s32 512, 512
      %39 = vsyncadd [#allocation6], %s38
      %s40 = sshll.u32 [#allocation7], 4
      %s41 = int_to_ptr.vmem [resolvable:$true] %s40
      %46 = dma.hbm_to_vmem [thread:$0]  %s2, 512, %s41, [#allocation6], 128, 128, 8
    $region13: #{tpu_custom_call.1} parent=1 // pred_fallthru
      _
    // Predicated region
    $region14: #{tpu_custom_call.1} parent=1 // pred_check
      _
    $region15: #{tpu_custom_call.1} parent=1 // pred_check_branch
      %48 = sbr.rel (0) target = $region17
    $region16: #{tpu_custom_call.1} parent=1 // pred_region
      %49 = dma.done [#allocation3], 256
    $region17: #{tpu_custom_call.1} parent=1 // pred_fallthru
      _
    // Predicated region
    $region18: #{tpu_custom_call.1} parent=1 // pred_check
      _
    $region19: #{tpu_custom_call.1} parent=1 // pred_check_branch
      %51 = sbr.rel (0) target = $region21
    $region20: #{tpu_custom_call.1} parent=1 // pred_region
      %52 = dma.done [#allocation6], 512
    $region21: #{tpu_custom_call.1} parent=1 // pred_fallthru
      _
    // Predicated region
    $region22: #{tpu_custom_call.1} parent=1 // pred_check
      _
    $region23: #{tpu_custom_call.1} parent=1 // pred_check_branch
      %54 = sbr.rel (0) target = $region25
    $region24: #{tpu_custom_call.1} parent=1 // pred_region
      %55 = dma.done [#allocation6], 512
    $region25: #{tpu_custom_call.1} parent=1 // pred_fallthru
      _
    %v56 = vld [vmem:[#allocation5] sm:$0xff]
    %v57 = vld [vmem:[#allocation5 + $0x8] sm:$0xff]
    %v58 = vld [vmem:[#allocation5 + $0x10] sm:$0xff]
    %v59 = vld [vmem:[#allocation5 + $0x18] sm:$0xff]
    %v60 = vld [vmem:[#allocation2] sm:$0xff]
    %v61 = vld [vmem:[#allocation2 + $0x8] sm:$0xff]
    %v62 = vld [vmem:[#allocation7] sm:$0xff]
    %v63 = vld [vmem:[#allocation7 + $0x8] sm:$0xff]
    %v64 = vld [vmem:[#allocation7 + $0x10] sm:$0xff]
    %v65 = vld [vmem:[#allocation7 + $0x18] sm:$0xff]
    %67 = vset.pattern.permute.xlu0 0
    %68 = vperm.xlu0 %67, %v62
    %v69 = vpop.permute.xlu0 %68
    %72 = vset.pattern.permute.xlu0 0
    %73 = vperm.xlu0 %72, %v63
    %v74 = vpop.permute.xlu0 %73
    %77 = vset.pattern.permute.xlu0 0
    %78 = vperm.xlu0 %77, %v64
    %v79 = vpop.permute.xlu0 %78
    %82 = vset.pattern.permute.xlu0 0
    %83 = vperm.xlu0 %82, %v65
    %v84 = vpop.permute.xlu0 %83
    %vm86 = vcmask 130048
    %v88 = vsel %vm86, %v56, 0
    %v91 = vsel %vm86, %v57, 0
    %v94 = vsel %vm86, %v58, 0
    %v97 = vsel %vm86, %v59, 0
    %99 = vmatprep.subr.mxu0 0.0
    %100 = vmatpush1.msra.mxu0 %v60
    %101 = vmatprep.subr.mxu0 0.0
    %102 = vmatpush1.msra.mxu0 %v61
    %103 = vmatprep.subr.mxu0 0.0
    %104 = vmatpush1.msra.mxu0 0.0
    %105 = vmatprep.subr.mxu0 0.0
    %106 = vmatpush1.msra.mxu0 0.0
    %107 = vmatprep.subr.mxu0 0.0
    %108 = vmatpush1.msra.mxu0 0.0
    %109 = vmatprep.subr.mxu0 0.0
    %110 = vmatpush1.msra.mxu0 0.0
    %111 = vmatprep.subr.mxu0 0.0
    %112 = vmatpush1.msra.mxu0 0.0
    %113 = vmatprep.subr.mxu0 0.0
    %114 = vmatpush1.msra.mxu0 0.0
    %115 = vmatprep.subr.mxu0 0.0
    %116 = vmatpush1.msra.mxu0 0.0
    %117 = vmatprep.subr.mxu0 0.0
    %118 = vmatpush1.msra.mxu0 0.0
    %119 = vmatprep.subr.mxu0 0.0
    %120 = vmatpush1.msra.mxu0 0.0
    %121 = vmatprep.subr.mxu0 0.0
    %122 = vmatpush1.msra.mxu0 0.0
    %123 = vmatprep.subr.mxu0 0.0
    %124 = vmatpush1.msra.mxu0 0.0
    %125 = vmatprep.subr.mxu0 0.0
    %126 = vmatpush1.msra.mxu0 0.0
    %127 = vmatprep.subr.mxu0 0.0
    %128 = vmatpush1.msra.mxu0 0.0
    %129 = vmatprep.subr.mxu0 0.0
    %130 = vmatpush1.msra.mxu0 0.0
    %131 = vmatprep.subr.mxu0 0.0
    %132 = vmatpush1.msra.mxu0 0.0
    %133 = vmatprep.subr.mxu0 0.0
    %134 = vmatpush1.msra.mxu0 0.0
    %135 = vmatprep.subr.mxu0 0.0
    %136 = vmatpush1.msra.mxu0 0.0
    %137 = vmatprep.subr.mxu0 0.0
    %138 = vmatpush1.msra.mxu0 0.0
    %139 = vmatprep.subr.mxu0 0.0
    %140 = vmatpush1.msra.mxu0 0.0
    %141 = vmatprep.subr.mxu0 0.0
    %142 = vmatpush1.msra.mxu0 0.0
    %143 = vmatprep.subr.mxu0 0.0
    %144 = vmatpush1.msra.mxu0 0.0
    %145 = vmatprep.subr.mxu0 0.0
    %146 = vmatpush1.msra.mxu0 0.0
    %147 = vmatprep.subr.mxu0 0.0
    %148 = vmatpush1.msra.mxu0 0.0
    %149 = vmatprep.subr.mxu0 0.0
    %150 = vmatpush1.msra.mxu0 0.0
    %151 = vmatprep.subr.mxu0 0.0
    %152 = vmatpush1.msra.mxu0 0.0
    %153 = vmatprep.subr.mxu0 0.0
    %154 = vmatpush1.msra.mxu0 0.0
    %155 = vmatprep.subr.mxu0 0.0
    %156 = vmatpush1.msra.mxu0 0.0
    %157 = vmatprep.subr.mxu0 0.0
    %158 = vmatpush1.msra.mxu0 0.0
    %159 = vmatprep.subr.mxu0 0.0
    %160 = vmatpush1.msra.mxu0 0.0
    %161 = vmatprep.subr.mxu0 0.0
    %162 = vmatpush1.msra.mxu0 0.0
    %163 = vmatprep.mubr.f32.mxu0 0.0
    %164 = vmatmul.mubr.f32.gmra.mrb[0].mxu0 %v88
    %v165 = vpop.f32.mrb[0].mxu0
    %v166 = vadd.f32 %v69, %v165
    %v167 = vpop.f32.mrb[0].mxu0
    %168 = vmatprep.mubr.f32.mxu0 0.0
    %169 = vmatmul.mubr.f32.gmra.mrb[0].mxu0 %v91
    %v170 = vpop.f32.mrb[0].mxu0
    %v171 = vadd.f32 %v74, %v170
    %v172 = vpop.f32.mrb[0].mxu0
    %173 = vmatprep.mubr.f32.mxu0 0.0
    %174 = vmatmul.mubr.f32.gmra.mrb[0].mxu0 %v94
    %v175 = vpop.f32.mrb[0].mxu0
    %v176 = vadd.f32 %v79, %v175
    %v177 = vpop.f32.mrb[0].mxu0
    %178 = vmatprep.mubr.f32.mxu0 0.0
    %179 = vmatmul.mubr.f32.gmra.mrb[0].mxu0 %v97
    %v180 = vpop.f32.mrb[0].mxu0
    %v181 = vadd.f32 %v84, %v180
    %v182 = vpop.f32.mrb[0].mxu0
    %183 = vdwg.mxu0
    %184 = vst [vmem:[#allocation8] sm:$0xff] %v166
    %185 = vst [vmem:[#allocation8 + $0x8] sm:$0xff] %v171
    %186 = vst [vmem:[#allocation8 + $0x10] sm:$0xff] %v176
    %187 = vst [vmem:[#allocation8 + $0x18] sm:$0xff] %v181
    // Predicated region
    $region26: #{tpu_custom_call.1} parent=1 // pred_check
      _
    $region27: #{tpu_custom_call.1} parent=1 // pred_check_branch
      %189 = sbr.rel (0) target = $region29
    $region28: #{tpu_custom_call.1} parent=1 // pred_region
      %s191 = ssub.s32 512, 512
      %192 = vsyncadd [#allocation4], %s191
      %s193 = sshll.u32 [#allocation8], 4
      %s194 = int_to_ptr.vmem [resolvable:$true] %s193
      %199 = dma.vmem_to_hbm [thread:$0]  %s194, 512, %s3, [#allocation4], 128, 128, 8
    $region29: #{tpu_custom_call.1} parent=1 // pred_fallthru
      _
    // Predicated region
    $region30: #{tpu_custom_call.1} parent=1 // pred_check
      _
    $region31: #{tpu_custom_call.1} parent=1 // pred_check_branch
      %201 = sbr.rel (0) target = $region33
    $region32: #{tpu_custom_call.1} parent=1 // pred_region
      %202 = dma.done [#allocation4], 512
    $region33: #{tpu_custom_call.1} parent=1 // pred_fallthru
      _
    %203 = vsyncpa [#allocation3], 1
    %204 = vsyncpa [#allocation6], 1
    %205 = vsyncpa [#allocation4], 1

</llo_original>
